<compile_context>
chip_gen: v5e
topology: v5e:2x2
jax: 0.10.0
libtpu: 0.0.40
codegen_flags: <defaults>
</compile_context>

<pallas_src>
from functools import partial

import jax
import jax.numpy as jnp
from jax.experimental import pallas as pl
from jax.experimental.pallas import tpu as pltpu


def _attn_kernel(x_ref, wqkv_ref, wp_ref, b_ref, o_ref, ybuf_ref, *,
                 num_heads, n_valid):
    TB, Np, C = x_ref.shape
    hd = C // num_heads

    # One tall, lane-dense activation slab for the fused projection.
    x2d = x_ref[...].reshape(TB * Np, C)                       # bf16

    # Fused QKV projection: (TB*Np, C) @ (C, 3C), bf16 MXU inputs, f32 acc.
    qkv = jnp.dot(x2d, wqkv_ref[...], preferred_element_type=jnp.float32)

    # 1/sqrt(hd) scale is already folded into the Q columns of wqkv.
    q_all = qkv[:, :C].reshape(TB, Np, C).astype(jnp.bfloat16)
    k_all = qkv[:, C:2 * C].reshape(TB, Np, C).astype(jnp.bfloat16)
    v_all = qkv[:, 2 * C:].reshape(TB, Np, C).astype(jnp.bfloat16)

    # Key-padding bias, hoisted out of the head loop (absent if no padding).
    key_bias = None
    if Np != n_valid:
        key_idx = jax.lax.broadcasted_iota(jnp.int32, (1, 1, Np), 2)
        key_bias = jnp.where(key_idx < n_valid, 0.0, -1e30).astype(jnp.float32)

    # Fully unrolled head loop with static lane slices.
    for h in range(num_heads):
        lo = h * hd
        q_h = q_all[:, :, lo:lo + hd]                          # (TB, Np, hd)
        k_h = k_all[:, :, lo:lo + hd]
        v_h = v_all[:, :, lo:lo + hd]

        # logits = (q * scale) @ k^T, batched over TB.
        logits = jax.lax.dot_general(
            q_h, k_h,
            dimension_numbers=(((2,), (2,)), ((0,), (0,))),
            preferred_element_type=jnp.float32)                # (TB, Np, Np)
        if key_bias is not None:
            logits = logits + key_bias

        # Max-stabilized softmax in f32; approx reciprocal uses the EUP slot.
        logits = logits - jnp.max(logits, axis=-1, keepdims=True)
        p = jnp.exp(logits)
        attn = p * pl.reciprocal(jnp.sum(p, axis=-1, keepdims=True),
                                 approx=True)

        # o_h = attn @ v (batched over TB).
        o_h = jax.lax.dot_general(
            attn.astype(jnp.bfloat16), v_h,
            dimension_numbers=(((2,), (1,)), ((0,), (0,))),
            preferred_element_type=jnp.float32)                # (TB, Np, hd)

        # Stage this head's output at its lane slice (no f32 accumulator RMW).
        ybuf_ref[:, lo:lo + hd] = (
            o_h.reshape(TB * Np, hd).astype(jnp.bfloat16))

    # Single lane-dense output projection across all heads, bias folded in.
    out = jnp.dot(ybuf_ref[...], wp_ref[...],
                  preferred_element_type=jnp.float32) + b_ref[...]
    o_ref[...] = out.reshape(TB, Np, C).astype(o_ref.dtype)


def _round_up(n, m):
    return ((n + m - 1) // m) * m


def _padded_seq_len(N):
    # Keep N if already friendly; otherwise pad to 8 (small N) or 128 (large N)
    # so reshapes, the softmax lane reduction and the N-wide stores are aligned.
    if N % 128 == 0 or (N <= 128 and N % 8 == 0):
        return N
    if N < 128:
        return _round_up(N, 8)
    return _round_up(N, 128)


def _per_tile_vmem_bytes(tb, Np, C):
    rows = tb * Np
    x_blk = rows * C * 2            # bf16 input block
    out_blk = rows * C * 4          # output block (f32 worst case)
    ybuf = rows * C * 2             # bf16 head staging scratch
    qkv = rows * 3 * C * 4          # f32 fused-projection intermediate
    attn = 2 * tb * Np * Np * 4     # logits + p in f32
    return 2 * (x_blk + out_blk) + ybuf + qkv + attn   # in/out double-buffered


def _pick_batch_tile(B, Np, C, budget=24 * 1024 * 1024):
    cands = []
    for tb in range(1, B + 1):
        if B % tb:
            continue
        if B >= 2 and B // tb < 2:          # keep >= 2 grid steps (dual-TC v7x)
            continue
        if _per_tile_vmem_bytes(tb, Np, C) > budget:
            continue
        cands.append(tb)
    if not cands:
        return 1
    good = [t for t in cands if t * Np <= 2048]   # aim for 512-2048 rows
    return max(good) if good else min(cands)


def prepare_attention_params(w_qkv, w_proj, b_proj, num_heads):
    """One-time (init-time) layout plumbing: fused / transposed bf16 weights."""
    C = w_proj.shape[0]
    assert C % num_heads == 0
    hd = C // num_heads
    scale = float(hd) ** -0.5
    # nn.Linear convention: weight is (out, in); y = x @ W.T.
    wqkv_t = jnp.transpose(w_qkv)                               # (C, 3C)
    # Fold the 1/sqrt(hd) scale into the Q output columns.
    wqkv_t = jnp.concatenate([wqkv_t[:, :C] * scale, wqkv_t[:, C:]], axis=1)
    wqkv = wqkv_t.astype(jnp.bfloat16)                          # (C, 3C)
    wp = jnp.transpose(w_proj).astype(jnp.bfloat16)             # (C, C)
    bias = jnp.reshape(b_proj, (1, C)).astype(jnp.float32)      # (1, C)
    return wqkv, wp, bias


def attention_pallas(x, wqkv, wp, bias, num_heads, *, batch_tile=None):
    """Multi-head self-attention forward (qkv_bias=False, dropout ratios 0)."""
    B, N, C = x.shape
    assert C % num_heads == 0
    Np = _padded_seq_len(N)
    out_dtype = x.dtype

    x_bf = x.astype(jnp.bfloat16)
    if Np != N:
        x_bf = jnp.pad(x_bf, ((0, 0), (0, Np - N), (0, 0)))

    TB = batch_tile if batch_tile is not None else _pick_batch_tile(B, Np, C)
    assert B % TB == 0

    resident_bytes = (wqkv.size + wp.size) * 2 + bias.size * 4
    vmem_limit = int(min(
        64 * 1024 * 1024,
        max(32 * 1024 * 1024,
            2 * (resident_bytes + _per_tile_vmem_bytes(TB, Np, C)))))

    kernel = partial(_attn_kernel, num_heads=num_heads, n_valid=N)
    resident = pl.BlockSpec(memory_space=pltpu.MemorySpace.VMEM)

    out = pl.pallas_call(
        kernel,
        out_shape=jax.ShapeDtypeStruct((B, Np, C), out_dtype),
        grid=(B // TB,),
        in_specs=[pl.BlockSpec((TB, Np, C), lambda b: (b, 0, 0)),
                  resident,    # wqkv (C, 3C) bf16, scale folded in
                  resident,    # wp   (C, C)  bf16
                  resident],   # bias (1, C)  f32
        out_specs=pl.BlockSpec((TB, Np, C), lambda b: (b, 0, 0)),
        scratch_shapes=[pltpu.VMEM((TB * Np, C), jnp.bfloat16)],
        compiler_params=pltpu.CompilerParams(
            dimension_semantics=("parallel",),
            vmem_limit_bytes=vmem_limit),
    )(x_bf, wqkv, wp, bias)

    return out[:, :N, :] if Np != N else out


def attention_reference(x, w_qkv, w_proj, b_proj, num_heads):
    """Pure-JAX f32 reference mirroring the PyTorch forward exactly."""
    B, N, C = x.shape
    hd = C // num_heads
    scale = float(hd) ** -0.5
    qkv = jnp.einsum('bnc,oc->bno', x, w_qkv)                   # (B, N, 3C)
    qkv = qkv.reshape(B, N, 3, num_heads, hd).transpose(2, 0, 3, 1, 4)
    q, k, v = qkv[0], qkv[1], qkv[2]                            # (B, H, N, hd)
    attn = jnp.einsum('bhnd,bhmd->bhnm', q, k) * scale
    attn = jax.nn.softmax(attn, axis=-1)
    out = jnp.einsum('bhnm,bhmd->bhnd', attn, v)                # (B, H, N, hd)
    out = out.transpose(0, 2, 1, 3).reshape(B, N, C)
    return jnp.einsum('bnc,oc->bno', out, w_proj) + b_proj.reshape(1, C)


if __name__ == "__main__":
    # Small shapes consistent with the module: B=2, seq N=8, dim C=32, heads=8.
    B, N, C, H = 2, 8, 32, 8

    key = jax.random.PRNGKey(0)
    kx, kw1, kw2, kb = jax.random.split(key, 4)

    x = jax.random.normal(kx, (B, N, C), dtype=jnp.float32)
    # Deterministic synthetic parameters (nn.Linear convention: (out, in)).
    w_qkv = jax.random.normal(kw1, (3 * C, C), dtype=jnp.float32) * 0.1
    w_proj = jax.random.normal(kw2, (C, C), dtype=jnp.float32) * 0.1
    b_proj = jax.random.normal(kb, (C,), dtype=jnp.float32) * 0.1

    # Init-time layout plumbing (done once per model, not per forward).
    wqkv, wp, bias = prepare_attention_params(w_qkv, w_proj, b_proj, H)

    out = attention_pallas(x, wqkv, wp, bias, H)
    out = jax.block_until_ready(out)

    ref = attention_reference(x, w_qkv, w_proj, b_proj, H)
    assert out.shape == (B, N, C)
    # bf16 MXU inputs (f32 accumulation) + approx reciprocal -> relaxed tol.
    assert jnp.allclose(out, ref, atol=3e-2, rtol=3e-2), "mismatch vs reference"

    print("KERNEL_OK")
</pallas_src>

<mosaic_0001>
module attributes {stable_mosaic.version = 11 : i64} {
  func.func @_attn_kernel(%arg0: i32, %arg1: memref<1x8x32xbf16, #tpu.memory_space<vmem>>, %arg2: memref<32x96xbf16, #tpu.memory_space<vmem>>, %arg3: memref<32x32xbf16, #tpu.memory_space<vmem>>, %arg4: memref<1x32xf32, #tpu.memory_space<vmem>>, %arg5: memref<1x8x32xf32, #tpu.memory_space<vmem>>, %arg6: memref<8x32xbf16, #tpu.memory_space<vmem>>) attributes {dimension_semantics = [#tpu.dimension_semantics<parallel>], iteration_bounds = array<i64: 2>, scalar_prefetch = 0 : i64, scratch_operands = 1 : i64, tpu.core_type = #tpu.core_type<tc>, window_params = [{transform_indices = @transform_0, window_bounds = array<i64: 1, 8, 32>}, {pipeline_mode = #tpu.pipeline_mode<synchronous>, transform_indices = @transform_1, window_bounds = array<i64: 32, 96>}, {pipeline_mode = #tpu.pipeline_mode<synchronous>, transform_indices = @transform_2, window_bounds = array<i64: 32, 32>}, {pipeline_mode = #tpu.pipeline_mode<synchronous>, transform_indices = @transform_3, window_bounds = array<i64: 1, 32>}, {transform_indices = @transform_4, window_bounds = array<i64: 1, 8, 32>}]} {
    %c0 = arith.constant 0 : index
    %c0_0 = arith.constant 0 : index
    %c0_1 = arith.constant 0 : index
    %0 = vector.load %arg1[%c0, %c0_0, %c0_1] : memref<1x8x32xbf16, #tpu.memory_space<vmem>>, vector<1x8x32xbf16>
    %1 = vector.shape_cast %0 : vector<1x8x32xbf16> to vector<8x32xbf16>
    %c0_2 = arith.constant 0 : index
    %c0_3 = arith.constant 0 : index
    %2 = vector.load %arg2[%c0_2, %c0_3] : memref<32x96xbf16, #tpu.memory_space<vmem>>, vector<32x96xbf16>
    %cst = arith.constant dense<0.000000e+00> : vector<8x96xf32>
    %3 = tpu.matmul %1, %2, %cst {dimension_numbers = #tpu.dot_dimension_numbers<[1], [0], [0], [1], [0, 0, 1, 1], [], []>} : vector<8x32xbf16>, vector<32x96xbf16>, vector<8x96xf32> -> vector<8x96xf32>
    %4 = vector.extract_strided_slice %3 {offsets = [0, 0], sizes = [8, 32], strides = [1, 1]} : vector<8x96xf32> to vector<8x32xf32>
    %5 = vector.shape_cast %4 : vector<8x32xf32> to vector<1x8x32xf32>
    %6 = arith.truncf %5 : vector<1x8x32xf32> to vector<1x8x32xbf16>
    %7 = vector.extract_strided_slice %3 {offsets = [0, 32], sizes = [8, 32], strides = [1, 1]} : vector<8x96xf32> to vector<8x32xf32>
    %8 = vector.shape_cast %7 : vector<8x32xf32> to vector<1x8x32xf32>
    %9 = arith.truncf %8 : vector<1x8x32xf32> to vector<1x8x32xbf16>
    %10 = vector.extract_strided_slice %3 {offsets = [0, 64], sizes = [8, 32], strides = [1, 1]} : vector<8x96xf32> to vector<8x32xf32>
    %11 = vector.shape_cast %10 : vector<8x32xf32> to vector<1x8x32xf32>
    %12 = arith.truncf %11 : vector<1x8x32xf32> to vector<1x8x32xbf16>
    %13 = vector.extract_strided_slice %6 {offsets = [0, 0, 0], sizes = [1, 8, 4], strides = [1, 1, 1]} : vector<1x8x32xbf16> to vector<1x8x4xbf16>
    %14 = vector.extract_strided_slice %9 {offsets = [0, 0, 0], sizes = [1, 8, 4], strides = [1, 1, 1]} : vector<1x8x32xbf16> to vector<1x8x4xbf16>
    %15 = vector.extract_strided_slice %12 {offsets = [0, 0, 0], sizes = [1, 8, 4], strides = [1, 1, 1]} : vector<1x8x32xbf16> to vector<1x8x4xbf16>
    %cst_4 = arith.constant dense<0.000000e+00> : vector<1x8x8xf32>
    %16 = tpu.matmul %13, %14, %cst_4 {dimension_numbers = #tpu.dot_dimension_numbers<[2], [2], [1], [1], [0, 0, 0, 1, 1, 1], [0], [0]>} : vector<1x8x4xbf16>, vector<1x8x4xbf16>, vector<1x8x8xf32> -> vector<1x8x8xf32>
    %cst_5 = arith.constant dense<0xFF800000> : vector<1x8xf32>
    %17 = vector.multi_reduction <maximumf>, %16, %cst_5 [2] : vector<1x8x8xf32> to vector<1x8xf32>
    %18 = vector.shape_cast %17 : vector<1x8xf32> to vector<1x8x1xf32>
    %19 = vector.broadcast %18 : vector<1x8x1xf32> to vector<1x8x8xf32>
    %20 = arith.subf %16, %19 : vector<1x8x8xf32>
    %21 = math.exp %20 : vector<1x8x8xf32>
    %cst_6 = arith.constant dense<0.000000e+00> : vector<1x8xf32>
    %22 = vector.multi_reduction <add>, %21, %cst_6 [2] : vector<1x8x8xf32> to vector<1x8xf32>
    %23 = vector.shape_cast %22 : vector<1x8xf32> to vector<1x8x1xf32>
    %24 = tpu.reciprocal %23 {approx = true} : vector<1x8x1xf32> -> vector<1x8x1xf32>
    %25 = vector.broadcast %24 : vector<1x8x1xf32> to vector<1x8x8xf32>
    %26 = arith.mulf %21, %25 : vector<1x8x8xf32>
    %27 = arith.truncf %26 : vector<1x8x8xf32> to vector<1x8x8xbf16>
    %cst_7 = arith.constant dense<0.000000e+00> : vector<1x8x4xf32>
    %28 = tpu.matmul %27, %15, %cst_7 {dimension_numbers = #tpu.dot_dimension_numbers<[2], [1], [1], [2], [0, 0, 0, 1, 1, 2], [0], [0]>} : vector<1x8x8xbf16>, vector<1x8x4xbf16>, vector<1x8x4xf32> -> vector<1x8x4xf32>
    %29 = vector.shape_cast %28 : vector<1x8x4xf32> to vector<8x4xf32>
    %30 = arith.truncf %29 : vector<8x4xf32> to vector<8x4xbf16>
    %c0_8 = arith.constant 0 : index
    %c0_9 = arith.constant 0 : index
    %31 = vector.load %arg6[%c0_8, %c0_9] : memref<8x32xbf16, #tpu.memory_space<vmem>>, vector<8x4xbf16>
    tpu.vector_store %arg6[%c0_8, %c0_9], %30 {strides = array<i32>} : memref<8x32xbf16, #tpu.memory_space<vmem>>, vector<8x4xbf16>,
    %32 = vector.extract_strided_slice %6 {offsets = [0, 0, 4], sizes = [1, 8, 4], strides = [1, 1, 1]} : vector<1x8x32xbf16> to vector<1x8x4xbf16>
    %33 = vector.extract_strided_slice %9 {offsets = [0, 0, 4], sizes = [1, 8, 4], strides = [1, 1, 1]} : vector<1x8x32xbf16> to vector<1x8x4xbf16>
    %34 = vector.extract_strided_slice %12 {offsets = [0, 0, 4], sizes = [1, 8, 4], strides = [1, 1, 1]} : vector<1x8x32xbf16> to vector<1x8x4xbf16>
    %cst_10 = arith.constant dense<0.000000e+00> : vector<1x8x8xf32>
    %35 = tpu.matmul %32, %33, %cst_10 {dimension_numbers = #tpu.dot_dimension_numbers<[2], [2], [1], [1], [0, 0, 0, 1, 1, 1], [0], [0]>} : vector<1x8x4xbf16>, vector<1x8x4xbf16>, vector<1x8x8xf32> -> vector<1x8x8xf32>
    %cst_11 = arith.constant dense<0xFF800000> : vector<1x8xf32>
    %36 = vector.multi_reduction <maximumf>, %35, %cst_11 [2] : vector<1x8x8xf32> to vector<1x8xf32>
    %37 = vector.shape_cast %36 : vector<1x8xf32> to vector<1x8x1xf32>
    %38 = vector.broadcast %37 : vector<1x8x1xf32> to vector<1x8x8xf32>
    %39 = arith.subf %35, %38 : vector<1x8x8xf32>
    %40 = math.exp %39 : vector<1x8x8xf32>
    %cst_12 = arith.constant dense<0.000000e+00> : vector<1x8xf32>
    %41 = vector.multi_reduction <add>, %40, %cst_12 [2] : vector<1x8x8xf32> to vector<1x8xf32>
    %42 = vector.shape_cast %41 : vector<1x8xf32> to vector<1x8x1xf32>
    %43 = tpu.reciprocal %42 {approx = true} : vector<1x8x1xf32> -> vector<1x8x1xf32>
    %44 = vector.broadcast %43 : vector<1x8x1xf32> to vector<1x8x8xf32>
    %45 = arith.mulf %40, %44 : vector<1x8x8xf32>
    %46 = arith.truncf %45 : vector<1x8x8xf32> to vector<1x8x8xbf16>
    %cst_13 = arith.constant dense<0.000000e+00> : vector<1x8x4xf32>
    %47 = tpu.matmul %46, %34, %cst_13 {dimension_numbers = #tpu.dot_dimension_numbers<[2], [1], [1], [2], [0, 0, 0, 1, 1, 2], [0], [0]>} : vector<1x8x8xbf16>, vector<1x8x4xbf16>, vector<1x8x4xf32> -> vector<1x8x4xf32>
    %48 = vector.shape_cast %47 : vector<1x8x4xf32> to vector<8x4xf32>
    %49 = arith.truncf %48 : vector<8x4xf32> to vector<8x4xbf16>
    %c0_14 = arith.constant 0 : index
    %c4 = arith.constant 4 : index
    %50 = vector.load %arg6[%c0_14, %c4] : memref<8x32xbf16, #tpu.memory_space<vmem>>, vector<8x4xbf16>
    tpu.vector_store %arg6[%c0_14, %c4], %49 {strides = array<i32>} : memref<8x32xbf16, #tpu.memory_space<vmem>>, vector<8x4xbf16>,
    %51 = vector.extract_strided_slice %6 {offsets = [0, 0, 8], sizes = [1, 8, 4], strides = [1, 1, 1]} : vector<1x8x32xbf16> to vector<1x8x4xbf16>
    %52 = vector.extract_strided_slice %9 {offsets = [0, 0, 8], sizes = [1, 8, 4], strides = [1, 1, 1]} : vector<1x8x32xbf16> to vector<1x8x4xbf16>
    %53 = vector.extract_strided_slice %12 {offsets = [0, 0, 8], sizes = [1, 8, 4], strides = [1, 1, 1]} : vector<1x8x32xbf16> to vector<1x8x4xbf16>
    %cst_15 = arith.constant dense<0.000000e+00> : vector<1x8x8xf32>
    %54 = tpu.matmul %51, %52, %cst_15 {dimension_numbers = #tpu.dot_dimension_numbers<[2], [2], [1], [1], [0, 0, 0, 1, 1, 1], [0], [0]>} : vector<1x8x4xbf16>, vector<1x8x4xbf16>, vector<1x8x8xf32> -> vector<1x8x8xf32>
    %cst_16 = arith.constant dense<0xFF800000> : vector<1x8xf32>
    %55 = vector.multi_reduction <maximumf>, %54, %cst_16 [2] : vector<1x8x8xf32> to vector<1x8xf32>
    %56 = vector.shape_cast %55 : vector<1x8xf32> to vector<1x8x1xf32>
    %57 = vector.broadcast %56 : vector<1x8x1xf32> to vector<1x8x8xf32>
    %58 = arith.subf %54, %57 : vector<1x8x8xf32>
    %59 = math.exp %58 : vector<1x8x8xf32>
    %cst_17 = arith.constant dense<0.000000e+00> : vector<1x8xf32>
    %60 = vector.multi_reduction <add>, %59, %cst_17 [2] : vector<1x8x8xf32> to vector<1x8xf32>
    %61 = vector.shape_cast %60 : vector<1x8xf32> to vector<1x8x1xf32>
    %62 = tpu.reciprocal %61 {approx = true} : vector<1x8x1xf32> -> vector<1x8x1xf32>
    %63 = vector.broadcast %62 : vector<1x8x1xf32> to vector<1x8x8xf32>
    %64 = arith.mulf %59, %63 : vector<1x8x8xf32>
    %65 = arith.truncf %64 : vector<1x8x8xf32> to vector<1x8x8xbf16>
    %cst_18 = arith.constant dense<0.000000e+00> : vector<1x8x4xf32>
    %66 = tpu.matmul %65, %53, %cst_18 {dimension_numbers = #tpu.dot_dimension_numbers<[2], [1], [1], [2], [0, 0, 0, 1, 1, 2], [0], [0]>} : vector<1x8x8xbf16>, vector<1x8x4xbf16>, vector<1x8x4xf32> -> vector<1x8x4xf32>
    %67 = vector.shape_cast %66 : vector<1x8x4xf32> to vector<8x4xf32>
    %68 = arith.truncf %67 : vector<8x4xf32> to vector<8x4xbf16>
    %c0_19 = arith.constant 0 : index
    %c8 = arith.constant 8 : index
    %69 = vector.load %arg6[%c0_19, %c8] : memref<8x32xbf16, #tpu.memory_space<vmem>>, vector<8x4xbf16>
    tpu.vector_store %arg6[%c0_19, %c8], %68 {strides = array<i32>} : memref<8x32xbf16, #tpu.memory_space<vmem>>, vector<8x4xbf16>,
    %70 = vector.extract_strided_slice %6 {offsets = [0, 0, 12], sizes = [1, 8, 4], strides = [1, 1, 1]} : vector<1x8x32xbf16> to vector<1x8x4xbf16>
    %71 = vector.extract_strided_slice %9 {offsets = [0, 0, 12], sizes = [1, 8, 4], strides = [1, 1, 1]} : vector<1x8x32xbf16> to vector<1x8x4xbf16>
    %72 = vector.extract_strided_slice %12 {offsets = [0, 0, 12], sizes = [1, 8, 4], strides = [1, 1, 1]} : vector<1x8x32xbf16> to vector<1x8x4xbf16>
    %cst_20 = arith.constant dense<0.000000e+00> : vector<1x8x8xf32>
    %73 = tpu.matmul %70, %71, %cst_20 {dimension_numbers = #tpu.dot_dimension_numbers<[2], [2], [1], [1], [0, 0, 0, 1, 1, 1], [0], [0]>} : vector<1x8x4xbf16>, vector<1x8x4xbf16>, vector<1x8x8xf32> -> vector<1x8x8xf32>
    %cst_21 = arith.constant dense<0xFF800000> : vector<1x8xf32>
    %74 = vector.multi_reduction <maximumf>, %73, %cst_21 [2] : vector<1x8x8xf32> to vector<1x8xf32>
    %75 = vector.shape_cast %74 : vector<1x8xf32> to vector<1x8x1xf32>
    %76 = vector.broadcast %75 : vector<1x8x1xf32> to vector<1x8x8xf32>
    %77 = arith.subf %73, %76 : vector<1x8x8xf32>
    %78 = math.exp %77 : vector<1x8x8xf32>
    %cst_22 = arith.constant dense<0.000000e+00> : vector<1x8xf32>
    %79 = vector.multi_reduction <add>, %78, %cst_22 [2] : vector<1x8x8xf32> to vector<1x8xf32>
    %80 = vector.shape_cast %79 : vector<1x8xf32> to vector<1x8x1xf32>
    %81 = tpu.reciprocal %80 {approx = true} : vector<1x8x1xf32> -> vector<1x8x1xf32>
    %82 = vector.broadcast %81 : vector<1x8x1xf32> to vector<1x8x8xf32>
    %83 = arith.mulf %78, %82 : vector<1x8x8xf32>
    %84 = arith.truncf %83 : vector<1x8x8xf32> to vector<1x8x8xbf16>
    %cst_23 = arith.constant dense<0.000000e+00> : vector<1x8x4xf32>
    %85 = tpu.matmul %84, %72, %cst_23 {dimension_numbers = #tpu.dot_dimension_numbers<[2], [1], [1], [2], [0, 0, 0, 1, 1, 2], [0], [0]>} : vector<1x8x8xbf16>, vector<1x8x4xbf16>, vector<1x8x4xf32> -> vector<1x8x4xf32>
    %86 = vector.shape_cast %85 : vector<1x8x4xf32> to vector<8x4xf32>
    %87 = arith.truncf %86 : vector<8x4xf32> to vector<8x4xbf16>
    %c0_24 = arith.constant 0 : index
    %c12 = arith.constant 12 : index
    %88 = vector.load %arg6[%c0_24, %c12] : memref<8x32xbf16, #tpu.memory_space<vmem>>, vector<8x4xbf16>
    tpu.vector_store %arg6[%c0_24, %c12], %87 {strides = array<i32>} : memref<8x32xbf16, #tpu.memory_space<vmem>>, vector<8x4xbf16>,
    %89 = vector.extract_strided_slice %6 {offsets = [0, 0, 16], sizes = [1, 8, 4], strides = [1, 1, 1]} : vector<1x8x32xbf16> to vector<1x8x4xbf16>
    %90 = vector.extract_strided_slice %9 {offsets = [0, 0, 16], sizes = [1, 8, 4], strides = [1, 1, 1]} : vector<1x8x32xbf16> to vector<1x8x4xbf16>
    %91 = vector.extract_strided_slice %12 {offsets = [0, 0, 16], sizes = [1, 8, 4], strides = [1, 1, 1]} : vector<1x8x32xbf16> to vector<1x8x4xbf16>
    %cst_25 = arith.constant dense<0.000000e+00> : vector<1x8x8xf32>
    %92 = tpu.matmul %89, %90, %cst_25 {dimension_numbers = #tpu.dot_dimension_numbers<[2], [2], [1], [1], [0, 0, 0, 1, 1, 1], [0], [0]>} : vector<1x8x4xbf16>, vector<1x8x4xbf16>, vector<1x8x8xf32> -> vector<1x8x8xf32>
    %cst_26 = arith.constant dense<0xFF800000> : vector<1x8xf32>
    %93 = vector.multi_reduction <maximumf>, %92, %cst_26 [2] : vector<1x8x8xf32> to vector<1x8xf32>
    %94 = vector.shape_cast %93 : vector<1x8xf32> to vector<1x8x1xf32>
    %95 = vector.broadcast %94 : vector<1x8x1xf32> to vector<1x8x8xf32>
    %96 = arith.subf %92, %95 : vector<1x8x8xf32>
    %97 = math.exp %96 : vector<1x8x8xf32>
    %cst_27 = arith.constant dense<0.000000e+00> : vector<1x8xf32>
    %98 = vector.multi_reduction <add>, %97, %cst_27 [2] : vector<1x8x8xf32> to vector<1x8xf32>
    %99 = vector.shape_cast %98 : vector<1x8xf32> to vector<1x8x1xf32>
    %100 = tpu.reciprocal %99 {approx = true} : vector<1x8x1xf32> -> vector<1x8x1xf32>
    %101 = vector.broadcast %100 : vector<1x8x1xf32> to vector<1x8x8xf32>
    %102 = arith.mulf %97, %101 : vector<1x8x8xf32>
    %103 = arith.truncf %102 : vector<1x8x8xf32> to vector<1x8x8xbf16>
    %cst_28 = arith.constant dense<0.000000e+00> : vector<1x8x4xf32>
    %104 = tpu.matmul %103, %91, %cst_28 {dimension_numbers = #tpu.dot_dimension_numbers<[2], [1], [1], [2], [0, 0, 0, 1, 1, 2], [0], [0]>} : vector<1x8x8xbf16>, vector<1x8x4xbf16>, vector<1x8x4xf32> -> vector<1x8x4xf32>
    %105 = vector.shape_cast %104 : vector<1x8x4xf32> to vector<8x4xf32>
    %106 = arith.truncf %105 : vector<8x4xf32> to vector<8x4xbf16>
    %c0_29 = arith.constant 0 : index
    %c16 = arith.constant 16 : index
    %107 = vector.load %arg6[%c0_29, %c16] : memref<8x32xbf16, #tpu.memory_space<vmem>>, vector<8x4xbf16>
    tpu.vector_store %arg6[%c0_29, %c16], %106 {strides = array<i32>} : memref<8x32xbf16, #tpu.memory_space<vmem>>, vector<8x4xbf16>,
    %108 = vector.extract_strided_slice %6 {offsets = [0, 0, 20], sizes = [1, 8, 4], strides = [1, 1, 1]} : vector<1x8x32xbf16> to vector<1x8x4xbf16>
    %109 = vector.extract_strided_slice %9 {offsets = [0, 0, 20], sizes = [1, 8, 4], strides = [1, 1, 1]} : vector<1x8x32xbf16> to vector<1x8x4xbf16>
    %110 = vector.extract_strided_slice %12 {offsets = [0, 0, 20], sizes = [1, 8, 4], strides = [1, 1, 1]} : vector<1x8x32xbf16> to vector<1x8x4xbf16>
    %cst_30 = arith.constant dense<0.000000e+00> : vector<1x8x8xf32>
    %111 = tpu.matmul %108, %109, %cst_30 {dimension_numbers = #tpu.dot_dimension_numbers<[2], [2], [1], [1], [0, 0, 0, 1, 1, 1], [0], [0]>} : vector<1x8x4xbf16>, vector<1x8x4xbf16>, vector<1x8x8xf32> -> vector<1x8x8xf32>
    %cst_31 = arith.constant dense<0xFF800000> : vector<1x8xf32>
    %112 = vector.multi_reduction <maximumf>, %111, %cst_31 [2] : vector<1x8x8xf32> to vector<1x8xf32>
    %113 = vector.shape_cast %112 : vector<1x8xf32> to vector<1x8x1xf32>
    %114 = vector.broadcast %113 : vector<1x8x1xf32> to vector<1x8x8xf32>
    %115 = arith.subf %111, %114 : vector<1x8x8xf32>
    %116 = math.exp %115 : vector<1x8x8xf32>
    %cst_32 = arith.constant dense<0.000000e+00> : vector<1x8xf32>
    %117 = vector.multi_reduction <add>, %116, %cst_32 [2] : vector<1x8x8xf32> to vector<1x8xf32>
    %118 = vector.shape_cast %117 : vector<1x8xf32> to vector<1x8x1xf32>
    %119 = tpu.reciprocal %118 {approx = true} : vector<1x8x1xf32> -> vector<1x8x1xf32>
    %120 = vector.broadcast %119 : vector<1x8x1xf32> to vector<1x8x8xf32>
    %121 = arith.mulf %116, %120 : vector<1x8x8xf32>
    %122 = arith.truncf %121 : vector<1x8x8xf32> to vector<1x8x8xbf16>
    %cst_33 = arith.constant dense<0.000000e+00> : vector<1x8x4xf32>
    %123 = tpu.matmul %122, %110, %cst_33 {dimension_numbers = #tpu.dot_dimension_numbers<[2], [1], [1], [2], [0, 0, 0, 1, 1, 2], [0], [0]>} : vector<1x8x8xbf16>, vector<1x8x4xbf16>, vector<1x8x4xf32> -> vector<1x8x4xf32>
    %124 = vector.shape_cast %123 : vector<1x8x4xf32> to vector<8x4xf32>
    %125 = arith.truncf %124 : vector<8x4xf32> to vector<8x4xbf16>
    %c0_34 = arith.constant 0 : index
    %c20 = arith.constant 20 : index
    %126 = vector.load %arg6[%c0_34, %c20] : memref<8x32xbf16, #tpu.memory_space<vmem>>, vector<8x4xbf16>
    tpu.vector_store %arg6[%c0_34, %c20], %125 {strides = array<i32>} : memref<8x32xbf16, #tpu.memory_space<vmem>>, vector<8x4xbf16>,
    %127 = vector.extract_strided_slice %6 {offsets = [0, 0, 24], sizes = [1, 8, 4], strides = [1, 1, 1]} : vector<1x8x32xbf16> to vector<1x8x4xbf16>
    %128 = vector.extract_strided_slice %9 {offsets = [0, 0, 24], sizes = [1, 8, 4], strides = [1, 1, 1]} : vector<1x8x32xbf16> to vector<1x8x4xbf16>
    %129 = vector.extract_strided_slice %12 {offsets = [0, 0, 24], sizes = [1, 8, 4], strides = [1, 1, 1]} : vector<1x8x32xbf16> to vector<1x8x4xbf16>
    %cst_35 = arith.constant dense<0.000000e+00> : vector<1x8x8xf32>
    %130 = tpu.matmul %127, %128, %cst_35 {dimension_numbers = #tpu.dot_dimension_numbers<[2], [2], [1], [1], [0, 0, 0, 1, 1, 1], [0], [0]>} : vector<1x8x4xbf16>, vector<1x8x4xbf16>, vector<1x8x8xf32> -> vector<1x8x8xf32>
    %cst_36 = arith.constant dense<0xFF800000> : vector<1x8xf32>
    %131 = vector.multi_reduction <maximumf>, %130, %cst_36 [2] : vector<1x8x8xf32> to vector<1x8xf32>
    %132 = vector.shape_cast %131 : vector<1x8xf32> to vector<1x8x1xf32>
    %133 = vector.broadcast %132 : vector<1x8x1xf32> to vector<1x8x8xf32>
    %134 = arith.subf %130, %133 : vector<1x8x8xf32>
    %135 = math.exp %134 : vector<1x8x8xf32>
    %cst_37 = arith.constant dense<0.000000e+00> : vector<1x8xf32>
    %136 = vector.multi_reduction <add>, %135, %cst_37 [2] : vector<1x8x8xf32> to vector<1x8xf32>
    %137 = vector.shape_cast %136 : vector<1x8xf32> to vector<1x8x1xf32>
    %138 = tpu.reciprocal %137 {approx = true} : vector<1x8x1xf32> -> vector<1x8x1xf32>
    %139 = vector.broadcast %138 : vector<1x8x1xf32> to vector<1x8x8xf32>
    %140 = arith.mulf %135, %139 : vector<1x8x8xf32>
    %141 = arith.truncf %140 : vector<1x8x8xf32> to vector<1x8x8xbf16>
    %cst_38 = arith.constant dense<0.000000e+00> : vector<1x8x4xf32>
    %142 = tpu.matmul %141, %129, %cst_38 {dimension_numbers = #tpu.dot_dimension_numbers<[2], [1], [1], [2], [0, 0, 0, 1, 1, 2], [0], [0]>} : vector<1x8x8xbf16>, vector<1x8x4xbf16>, vector<1x8x4xf32> -> vector<1x8x4xf32>
    %143 = vector.shape_cast %142 : vector<1x8x4xf32> to vector<8x4xf32>
    %144 = arith.truncf %143 : vector<8x4xf32> to vector<8x4xbf16>
    %c0_39 = arith.constant 0 : index
    %c24 = arith.constant 24 : index
    %145 = vector.load %arg6[%c0_39, %c24] : memref<8x32xbf16, #tpu.memory_space<vmem>>, vector<8x4xbf16>
    tpu.vector_store %arg6[%c0_39, %c24], %144 {strides = array<i32>} : memref<8x32xbf16, #tpu.memory_space<vmem>>, vector<8x4xbf16>,
    %146 = vector.extract_strided_slice %6 {offsets = [0, 0, 28], sizes = [1, 8, 4], strides = [1, 1, 1]} : vector<1x8x32xbf16> to vector<1x8x4xbf16>
    %147 = vector.extract_strided_slice %9 {offsets = [0, 0, 28], sizes = [1, 8, 4], strides = [1, 1, 1]} : vector<1x8x32xbf16> to vector<1x8x4xbf16>
    %148 = vector.extract_strided_slice %12 {offsets = [0, 0, 28], sizes = [1, 8, 4], strides = [1, 1, 1]} : vector<1x8x32xbf16> to vector<1x8x4xbf16>
    %cst_40 = arith.constant dense<0.000000e+00> : vector<1x8x8xf32>
    %149 = tpu.matmul %146, %147, %cst_40 {dimension_numbers = #tpu.dot_dimension_numbers<[2], [2], [1], [1], [0, 0, 0, 1, 1, 1], [0], [0]>} : vector<1x8x4xbf16>, vector<1x8x4xbf16>, vector<1x8x8xf32> -> vector<1x8x8xf32>
    %cst_41 = arith.constant dense<0xFF800000> : vector<1x8xf32>
    %150 = vector.multi_reduction <maximumf>, %149, %cst_41 [2] : vector<1x8x8xf32> to vector<1x8xf32>
    %151 = vector.shape_cast %150 : vector<1x8xf32> to vector<1x8x1xf32>
    %152 = vector.broadcast %151 : vector<1x8x1xf32> to vector<1x8x8xf32>
    %153 = arith.subf %149, %152 : vector<1x8x8xf32>
    %154 = math.exp %153 : vector<1x8x8xf32>
    %cst_42 = arith.constant dense<0.000000e+00> : vector<1x8xf32>
    %155 = vector.multi_reduction <add>, %154, %cst_42 [2] : vector<1x8x8xf32> to vector<1x8xf32>
    %156 = vector.shape_cast %155 : vector<1x8xf32> to vector<1x8x1xf32>
    %157 = tpu.reciprocal %156 {approx = true} : vector<1x8x1xf32> -> vector<1x8x1xf32>
    %158 = vector.broadcast %157 : vector<1x8x1xf32> to vector<1x8x8xf32>
    %159 = arith.mulf %154, %158 : vector<1x8x8xf32>
    %160 = arith.truncf %159 : vector<1x8x8xf32> to vector<1x8x8xbf16>
    %cst_43 = arith.constant dense<0.000000e+00> : vector<1x8x4xf32>
    %161 = tpu.matmul %160, %148, %cst_43 {dimension_numbers = #tpu.dot_dimension_numbers<[2], [1], [1], [2], [0, 0, 0, 1, 1, 2], [0], [0]>} : vector<1x8x8xbf16>, vector<1x8x4xbf16>, vector<1x8x4xf32> -> vector<1x8x4xf32>
    %162 = vector.shape_cast %161 : vector<1x8x4xf32> to vector<8x4xf32>
    %163 = arith.truncf %162 : vector<8x4xf32> to vector<8x4xbf16>
    %c0_44 = arith.constant 0 : index
    %c28 = arith.constant 28 : index
    %164 = vector.load %arg6[%c0_44, %c28] : memref<8x32xbf16, #tpu.memory_space<vmem>>, vector<8x4xbf16>
    tpu.vector_store %arg6[%c0_44, %c28], %163 {strides = array<i32>} : memref<8x32xbf16, #tpu.memory_space<vmem>>, vector<8x4xbf16>,
    %c0_45 = arith.constant 0 : index
    %c0_46 = arith.constant 0 : index
    %165 = vector.load %arg6[%c0_45, %c0_46] : memref<8x32xbf16, #tpu.memory_space<vmem>>, vector<8x32xbf16>
    %c0_47 = arith.constant 0 : index
    %c0_48 = arith.constant 0 : index
    %166 = vector.load %arg3[%c0_47, %c0_48] : memref<32x32xbf16, #tpu.memory_space<vmem>>, vector<32x32xbf16>
    %cst_49 = arith.constant dense<0.000000e+00> : vector<8x32xf32>
    %167 = tpu.matmul %165, %166, %cst_49 {dimension_numbers = #tpu.dot_dimension_numbers<[1], [0], [0], [1], [0, 0, 1, 1], [], []>} : vector<8x32xbf16>, vector<32x32xbf16>, vector<8x32xf32> -> vector<8x32xf32>
    %c0_50 = arith.constant 0 : index
    %c0_51 = arith.constant 0 : index
    %168 = vector.load %arg4[%c0_50, %c0_51] : memref<1x32xf32, #tpu.memory_space<vmem>>, vector<1x32xf32>
    %169 = vector.broadcast %168 : vector<1x32xf32> to vector<8x32xf32>
    %170 = arith.addf %167, %169 : vector<8x32xf32>
    %171 = vector.shape_cast %170 : vector<8x32xf32> to vector<1x8x32xf32>
    %c0_52 = arith.constant 0 : index
    %c0_53 = arith.constant 0 : index
    %c0_54 = arith.constant 0 : index
    %172 = vector.load %arg5[%c0_52, %c0_53, %c0_54] : memref<1x8x32xf32, #tpu.memory_space<vmem>>, vector<1x8x32xf32>
    tpu.vector_store %arg5[%c0_52, %c0_53, %c0_54], %171 {strides = array<i32>} : memref<1x8x32xf32, #tpu.memory_space<vmem>>, vector<1x8x32xf32>,
    return
  }
  func.func @transform_0(%arg0: i32) -> (i32, i32, i32) {
    %c0_i32 = arith.constant 0 : i32
    %c0_i32_0 = arith.constant 0 : i32
    %c0_i32_1 = arith.constant 0 : i32
    return %arg0, %c0_i32, %c0_i32_0 : i32, i32, i32
  }
  func.func @transform_1(%arg0: i32) -> (i32, i32) {
    %c0_i32 = arith.constant 0 : i32
    %c0_i32_0 = arith.constant 0 : i32
    %c0_i32_1 = arith.constant 0 : i32
    return %c0_i32, %c0_i32_0 : i32, i32
  }
  func.func @transform_2(%arg0: i32) -> (i32, i32) {
    %c0_i32 = arith.constant 0 : i32
    %c0_i32_0 = arith.constant 0 : i32
    %c0_i32_1 = arith.constant 0 : i32
    return %c0_i32, %c0_i32_0 : i32, i32
  }
  func.func @transform_3(%arg0: i32) -> (i32, i32) {
    %c0_i32 = arith.constant 0 : i32
    %c0_i32_0 = arith.constant 0 : i32
    %c0_i32_1 = arith.constant 0 : i32
    return %c0_i32, %c0_i32_0 : i32, i32
  }
  func.func @transform_4(%arg0: i32) -> (i32, i32, i32) {
    %c0_i32 = arith.constant 0 : i32
    %c0_i32_0 = arith.constant 0 : i32
    %c0_i32_1 = arith.constant 0 : i32
    return %arg0, %c0_i32, %c0_i32_0 : i32, i32, i32
  }
}

</mosaic_0001>

<llo_original>
// kernel: tpu_custom_call.1
$region0: #{tpu_custom_call.1}
  #allocation0 [shape = 'u32[]', space=smem, size = 0x4, offset = 0x4, fixed_abs, tag = 'smem constant byte address 0x4 - core index']
  #allocation1 [shape = 'u32[72,128]{1,0:T(1,128)}', space=vmem, size = 0x9000, scoped, tag = 'internal scratch']
  #allocation2 [shape = 'bf16[8,32]{1,0:T(8,128)(2,1)}', space=vmem, size = 0x800, scoped, tag = 'scratch operand']
  %s0 = inlined_call_operand.hbm [shape: bf16[2,8,32], index: 0, kind: input, shape index: {}]
  %s1 = inlined_call_operand.hbm [shape: bf16[32,96], index: 1, kind: input, shape index: {}]
  %s2 = inlined_call_operand.hbm [shape: bf16[32,32], index: 2, kind: input, shape index: {}]
  %s3 = inlined_call_operand.vmem [shape: f32[1,32], index: 3, kind: input, shape index: {}]
  %s4 = inlined_call_operand.hbm [shape: f32[2,8,32], index: 4, kind: output, shape index: {}]
  %s5 = sld [smem:[#allocation0]]
  $region61: #{tpu_custom_call.1} parent=0
    _
  %s7 = ssub.s32 1, %s5
  %s8 = scalar_select 0, %s7, %s5
  $region1: #{tpu_custom_call.1} parent=0
    #allocation3 [shape = 'u8[4096]{0}', space=vmem, size = 0x1000, scoped, tag = 'input window, operand 0']
    #allocation4 [shape = 's32[2]{0}', space=sflag, size = 0x8, scoped, tag = 'scoped memory for tpu_custom_call.1']
    #allocation5 [shape = 's32[2]{0}', space=sflag, size = 0x8, scoped, tag = 'scoped memory for tpu_custom_call.1']
    #allocation6 [shape = 'u8[8192]{0}', space=vmem, size = 0x2000, scoped, tag = 'input window, operand 1, single buffered']
    #allocation7 [shape = 's32[1]{0}', space=sflag, size = 0x4, scoped, tag = 'scoped memory for tpu_custom_call.1']
    #allocation8 [shape = 'u8[8192]{0}', space=vmem, size = 0x2000, scoped, tag = 'input window, operand 2, single buffered']
    #allocation9 [shape = 'u8[8192]{0}', space=vmem, size = 0x2000, scoped, tag = 'output window, operand 0']
    %9 = vsyncpa [#allocation4], 0
    %s10 = scalar_lea.sflag [#allocation4], 1
    %11 = vsyncpa %s10, 0
    %12 = vsyncpa [#allocation7], 0
    %13 = vsyncpa [#allocation5], 0
    %s14 = scalar_lea.sflag [#allocation5], 1
    %15 = vsyncpa %s14, 0
    loop: start=0, step=1, limit=4
    $region2: #{tpu_custom_call.1} parent=1 // loop_pre_header
      _
    $region3: #{tpu_custom_call.1} parent=1 // loop_header
      %s17 = sphi 0, %s21
      %p18 = scmp.ge.s32.totalorder %s17, 4
      %s27 = sphi 0, %s29
      %s30 = sphi 0, %s27
      %s31 = sphi 0, %s30
      %s47 = sphi 0, %s31
      %s51 = sphi 0, %s51
      %s53 = sphi 0, %s51
      %s54 = sphi 0, %s53
      %s68 = sphi 0, %s54
      %s72 = sphi 0, %s72
      %s74 = sphi 0, %s72
      %s75 = sphi 0, %s74
      %s89 = sphi 0, %s75
      %s93 = sphi 0, %s93
      %s95 = sphi 0, %s93
      %s96 = sphi 0, %s95
      %s110 = sphi 0, %s96
      %s116 = sphi 0, %s118
      %s119 = sphi 0, %s116
      %s120 = sphi 0, %s119
      %s136 = sphi 0, %s120
    $region4: #{tpu_custom_call.1} parent=1 // loop_header_branch
      %20 = sbr.rel (%p18) target = $region8
    $region5: #{tpu_custom_call.1} parent=1 // loop_body
      %s22 = ssub.s32 %s17, 1
      %s23 = ssub.s32 %s17, 2
      %s24 = sadd.s32 %s17, 1
      %s25 = ssub.s32 %s17, %s24
      %p26 = scmp.eq.s32.totalorder %s25, 0
      %s28 = sadd.s32 %s27, 1
      %s29 = scalar_select %p26, %s27, %s28
      %p32 = pneg %p26
      %p33 = scmp.eq.s32.totalorder %s17, 1
      %p34 = por %p32, %p33
      %p35 = scmp.ne.s32.totalorder %s27, %s30
      %p36 = scmp.eq.s32.totalorder %s17, 0
      %p37 = por %p35, %p36
      %p38 = scmp.ne.s32.totalorder %s27, %s30
      %p39 = scmp.eq.s32.totalorder %s22, 1
      %p40 = por %p38, %p39
      %p41 = scmp.ne.s32.totalorder %s30, %s31
      %p42 = scmp.eq.s32.totalorder %s22, 0
      %p43 = por %p41, %p42
      %p44 = scmp.ne.s32.totalorder %s30, %s31
      %p45 = scmp.eq.s32.totalorder %s23, 1
      %p46 = por %p44, %p45
      %p48 = scmp.ne.s32.totalorder %s31, %s47
      %p49 = scmp.eq.s32.totalorder %s23, 0
      %p50 = por %p48, %p49
      %s52 = sadd.s32 %s51, 1
      %p55 = scmp.eq.s32.totalorder %s17, 1
      %p56 = scmp.ne.s32.totalorder %s51, %s53
      %p57 = scmp.eq.s32.totalorder %s17, 0
      %p58 = por %p56, %p57
      %p59 = scmp.ne.s32.totalorder %s51, %s53
      %p60 = scmp.eq.s32.totalorder %s22, 1
      %p61 = por %p59, %p60
      %p62 = scmp.ne.s32.totalorder %s53, %s54
      %p63 = scmp.eq.s32.totalorder %s22, 0
      %p64 = por %p62, %p63
      %p65 = scmp.ne.s32.totalorder %s53, %s54
      %p66 = scmp.eq.s32.totalorder %s23, 1
      %p67 = por %p65, %p66
      %p69 = scmp.ne.s32.totalorder %s54, %s68
      %p70 = scmp.eq.s32.totalorder %s23, 0
      %p71 = por %p69, %p70
      %s73 = sadd.s32 %s72, 1
      %p76 = scmp.eq.s32.totalorder %s17, 1
      %p77 = scmp.ne.s32.totalorder %s72, %s74
      %p78 = scmp.eq.s32.totalorder %s17, 0
      %p79 = por %p77, %p78
      %p80 = scmp.ne.s32.totalorder %s72, %s74
      %p81 = scmp.eq.s32.totalorder %s22, 1
      %p82 = por %p80, %p81
      %p83 = scmp.ne.s32.totalorder %s74, %s75
      %p84 = scmp.eq.s32.totalorder %s22, 0
      %p85 = por %p83, %p84
      %p86 = scmp.ne.s32.totalorder %s74, %s75
      %p87 = scmp.eq.s32.totalorder %s23, 1
      %p88 = por %p86, %p87
      %p90 = scmp.ne.s32.totalorder %s75, %s89
      %p91 = scmp.eq.s32.totalorder %s23, 0
      %p92 = por %p90, %p91
      %s94 = sadd.s32 %s93, 1
      %p97 = scmp.eq.s32.totalorder %s17, 1
      %p98 = scmp.ne.s32.totalorder %s93, %s95
      %p99 = scmp.eq.s32.totalorder %s17, 0
      %p100 = por %p98, %p99
      %p101 = scmp.ne.s32.totalorder %s93, %s95
      %p102 = scmp.eq.s32.totalorder %s22, 1
      %p103 = por %p101, %p102
      %p104 = scmp.ne.s32.totalorder %s95, %s96
      %p105 = scmp.eq.s32.totalorder %s22, 0
      %p106 = por %p104, %p105
      %p107 = scmp.ne.s32.totalorder %s95, %s96
      %p108 = scmp.eq.s32.totalorder %s23, 1
      %p109 = por %p107, %p108
      %p111 = scmp.ne.s32.totalorder %s96, %s110
      %p112 = scmp.eq.s32.totalorder %s23, 0
      %p113 = por %p111, %p112
      %s114 = ssub.s32 %s17, %s24
      %p115 = scmp.eq.s32.totalorder %s114, 0
      %s117 = sadd.s32 %s116, 1
      %s118 = scalar_select %p115, %s116, %s117
      %p121 = pneg %p115
      %p122 = scmp.eq.s32.totalorder %s17, 1
      %p123 = por %p121, %p122
      %p124 = scmp.ne.s32.totalorder %s116, %s119
      %p125 = scmp.eq.s32.totalorder %s17, 0
      %p126 = por %p124, %p125
      %p127 = scmp.ne.s32.totalorder %s116, %s119
      %p128 = scmp.eq.s32.totalorder %s22, 1
      %p129 = por %p127, %p128
      %p130 = scmp.ne.s32.totalorder %s119, %s120
      %p131 = scmp.eq.s32.totalorder %s22, 0
      %p132 = por %p130, %p131
      %p133 = scmp.ne.s32.totalorder %s119, %s120
      %p134 = scmp.eq.s32.totalorder %s23, 1
      %p135 = por %p133, %p134
      %p137 = scmp.ne.s32.totalorder %s120, %s136
      %p138 = scmp.eq.s32.totalorder %s23, 0
      %p139 = por %p137, %p138
      %p140 = scmp.le.s32.totalorder 1, %s17
      %p141 = scmp.lt.s32.totalorder %s17, 3
      %p142 = pnand %p140, %p141
      %p143 = pneg %p142
      // Predicated region
      $region9: #{tpu_custom_call.1} parent=5 // pred_check
        _
      $region10: #{tpu_custom_call.1} parent=5 // pred_check_branch
        %145 = sbr.rel (%p142) target = $region12
      $region11: #{tpu_custom_call.1} parent=5 // pred_region
        %s146 = ssub.s32 %s17, 1
        // Predicated region
        $region13: #{tpu_custom_call.1} parent=11 // pred_check
          %p147 = pneg %p64
        $region14: #{tpu_custom_call.1} parent=11 // pred_check_branch
          %149 = sbr.rel (%p147) target = $region16
        $region15: #{tpu_custom_call.1} parent=11 // pred_region
          %151 = vsyncadd [#allocation7], 0
          %s152 = sshll.u32 %s1, 4
          %s153 = int_to_ptr.hbm [resolvable:$true] %s152
          %s154 = sshll.u32 [#allocation6], 4
          %s155 = int_to_ptr.vmem [resolvable:$true] %s154
          %160 = dma.hbm_to_vmem [thread:$0]  %s153, 256, %s155, [#allocation7], 64, 64, 4
        $region16: #{tpu_custom_call.1} parent=11 // pred_fallthru
          _
        // Predicated region
        $region17: #{tpu_custom_call.1} parent=11 // pred_check
          %p161 = pneg %p85
        $region18: #{tpu_custom_call.1} parent=11 // pred_check_branch
          %163 = sbr.rel (%p161) target = $region20
        $region19: #{tpu_custom_call.1} parent=11 // pred_region
          %165 = vsyncadd [#allocation7], 0
          %s166 = sshll.u32 %s2, 4
          %s167 = int_to_ptr.hbm [resolvable:$true] %s166
          %s168 = sshll.u32 [#allocation8], 4
          %s169 = int_to_ptr.vmem [resolvable:$true] %s168
          %174 = dma.hbm_to_vmem [thread:$0]  %s167, 256, %s169, [#allocation7], 64, 64, 4
        $region20: #{tpu_custom_call.1} parent=11 // pred_fallthru
          _
        // Predicated region
        $region21: #{tpu_custom_call.1} parent=11 // pred_check
          %p175 = pneg %p106
        $region22: #{tpu_custom_call.1} parent=11 // pred_check_branch
          %177 = sbr.rel (%p175) target = $region24
        $region23: #{tpu_custom_call.1} parent=11 // pred_region
          _
        $region24: #{tpu_custom_call.1} parent=11 // pred_fallthru
          _
      $region12: #{tpu_custom_call.1} parent=5 // pred_fallthru
        _
      %p178 = scmp.lt.s32.totalorder %s17, 2
      // Predicated region
      $region25: #{tpu_custom_call.1} parent=5 // pred_check
        %p179 = pneg %p178
      $region26: #{tpu_custom_call.1} parent=5 // pred_check_branch
        %181 = sbr.rel (%p179) target = $region28
      $region27: #{tpu_custom_call.1} parent=5 // pred_region
        // Predicated region
        $region29: #{tpu_custom_call.1} parent=27 // pred_check
          %p182 = pneg %p37
        $region30: #{tpu_custom_call.1} parent=27 // pred_check_branch
          %184 = sbr.rel (%p182) target = $region32
        $region31: #{tpu_custom_call.1} parent=27 // pred_region
          %s185 = sand.u32 %s27, 1
          %s186 = scalar_lea.sflag [#allocation4], %s185
          %s187 = sand.u32 %s27, 1
          %s188 = smul.addr %s187, 4
          %s189 = scalar_lea.vmem [#allocation3], %s188
          %191 = vsyncadd %s186, 0
          %s192 = smul.addr %s17, 4
          %s193 = scalar_lea.hbm %s0, %s192
          %s195 = sshll.u32 %s193, 4
          %s196 = int_to_ptr.hbm [resolvable:$true] %s195
          %s197 = sshll.u32 %s189, 4
          %s198 = int_to_ptr.vmem [resolvable:$true] %s197
          %200 = dma.hbm_to_vmem [thread:$0]  %s196, 64, %s198, %s186
        $region32: #{tpu_custom_call.1} parent=27 // pred_fallthru
          _
      $region28: #{tpu_custom_call.1} parent=5 // pred_fallthru
        _
      %p201 = scmp.le.s32.totalorder 1, %s17
      %p202 = scmp.lt.s32.totalorder %s17, 3
      %p203 = pnand %p201, %p202
      %p204 = pneg %p203
      // Predicated region
      $region33: #{tpu_custom_call.1} parent=5 // pred_check
        _
      $region34: #{tpu_custom_call.1} parent=5 // pred_check_branch
        %206 = sbr.rel (%p203) target = $region36
      $region35: #{tpu_custom_call.1} parent=5 // pred_region
        %s207 = ssub.s32 %s17, 1
        %s208 = sand.u32 %s30, 1
        %s209 = scalar_lea.sflag [#allocation4], %s208
        %s210 = sand.u32 %s30, 1
        %s211 = smul.addr %s210, 4
        %s212 = scalar_lea.vmem [#allocation3], %s211
        // Predicated region
        $region37: #{tpu_custom_call.1} parent=35 // pred_check
          %p213 = pneg %p43
        $region38: #{tpu_custom_call.1} parent=35 // pred_check_branch
          %215 = sbr.rel (%p213) target = $region40
        $region39: #{tpu_custom_call.1} parent=35 // pred_region
          %217 = dma.done %s209, 64
        $region40: #{tpu_custom_call.1} parent=35 // pred_fallthru
          _
        // Predicated region
        $region41: #{tpu_custom_call.1} parent=35 // pred_check
          %p218 = pneg %p64
        $region42: #{tpu_custom_call.1} parent=35 // pred_check_branch
          %220 = sbr.rel (%p218) target = $region44
        $region43: #{tpu_custom_call.1} parent=35 // pred_region
          %222 = dma.done [#allocation7], 256
        $region44: #{tpu_custom_call.1} parent=35 // pred_fallthru
          _
        // Predicated region
        $region45: #{tpu_custom_call.1} parent=35 // pred_check
          %p223 = pneg %p85
        $region46: #{tpu_custom_call.1} parent=35 // pred_check_branch
          %225 = sbr.rel (%p223) target = $region48
        $region47: #{tpu_custom_call.1} parent=35 // pred_region
          %227 = dma.done [#allocation7], 256
        $region48: #{tpu_custom_call.1} parent=35 // pred_fallthru
          _
        %s228 = sand.u32 %s30, 1
        %s229 = scalar_lea.sflag [#allocation4], %s228
        %s230 = sand.u32 %s30, 1
        %s231 = smul.addr %s230, 4
        %s232 = scalar_lea.vmem [#allocation3], %s231
        %p233 = pneg %p43
        %p234 = pneg %p40
        %p235 = pneg %p64
        %p236 = pneg %p61
        %p237 = pneg %p85
        %p238 = pneg %p82
        %p239 = pneg %p106
        %p240 = pneg %p103
        %p241 = pneg %p132
        %p242 = pneg %p129
        %s243 = sand.u32 %s119, 1
        %s244 = scalar_lea.sflag [#allocation5], %s243
        %s245 = sand.u32 %s119, 1
        %s246 = smul.addr %s245, 8
        %s247 = scalar_lea.vmem [#allocation9], %s246
        %v249 = vld [vmem:[%s212] sm:$0xf]
        %v250 = vld [vmem:[#allocation6] sm:$0xf]
        %v251 = vld [vmem:[#allocation6 + $0x4] sm:$0xf]
        %v252 = vld [vmem:[#allocation6 + $0x8] sm:$0xf]
        %v253 = vld [vmem:[#allocation6 + $0xc] sm:$0xf]
        %v258 = vunpack.c.l.b16 %v250
        %v259 = vunpack.c.l.b16 %v251
        %v260 = vunpack.c.l.b16 %v252
        %v261 = vunpack.c.l.b16 %v253
        %v262 = vpack.c.b16 %v259, %v258
        %v263 = vpack.c.b16 %v261, %v260
        %vm266 = vcmask 261120
        %v268 = vsel %vm266, %v249, 0
        %270 = vmatpush.bf16.msra.mxu0 0
        %271 = vmatpush.bf16.msra.mxu0 0
        %272 = vmatpush.bf16.msra.mxu0 0
        %273 = vmatpush.bf16.msra.mxu0 0
        %274 = vmatpush.bf16.msra.mxu0 0
        %275 = vmatpush.bf16.msra.mxu0 0
        %276 = vmatpush.bf16.msra.mxu0 %v263
        %277 = vmatpush.bf16.msra.mxu0 %v262
        %278 = vmatmul.bf16.gmra.mxu0 %v268
        %v279 = vpop.f32.mrf.mxu0
        %v280 = vadd.f32 0.0, %v279
        %v281 = vpop.f32.mrf.mxu0
        %282 = vdwg.mxu0
        %v283 = vpack.c.bf16 %v280, %v280
        %v285 = vunpack.c.l.b16 %v283
        %v286 = vpack.c.b16 %v285, %v285
        %287 = vrot.lane.b32.xlu0 %v286, 96
        %v288 = vpop.permute.xlu0 %287
        %vm289 = vcmask 31744
        %v291 = vsel %vm289, %v283, 0
        %v294 = vsel %vm289, %v288, 0
        %296 = vmatpush.bf16.xpose.msra.mxu0 0
        %297 = vmatpush.bf16.xpose.msra.mxu0 0
        %298 = vmatpush.bf16.xpose.msra.mxu0 0
        %299 = vmatpush.bf16.xpose.msra.mxu0 0
        %300 = vmatpush.bf16.xpose.msra.mxu0 0
        %301 = vmatpush.bf16.xpose.msra.mxu0 0
        %302 = vmatpush.bf16.xpose.msra.mxu0 0
        %303 = vmatpush.bf16.xpose.msra.mxu0 %v294
        %304 = vmatmul.bf16.gmra.mxu0 %v291
        %v305 = vpop.f32.mrf.mxu0
        %v306 = vadd.f32 0.0, %v305
        %v307 = vpop.f32.mrf.mxu0
        %308 = vdwg.mxu0
        %vm309 = vcmask 64512
        %v310 = vsel %vm309, %v306, -inf
        %311 = vmax.xlane.f32.xlu0 %v310
        %v312 = vpop.xlane.xlu0 %311
        %v313 = vsub.f32 %v306, %v312
        %v314 = vmul.f32 %v313, 1.442695
        %v315 = vpow.pop %v314
        %v316 = vsel %vm309, %v315, 0.0
        %317 = vadd.xlane.f32.xlu0 %v316
        %v318 = vpop.xlane.xlu0 %317
        %v319 = vrcp.pop %v318
        %v320 = vmul.f32 %v315, %v319
        %v321 = vpack.c.bf16 %v320, %v320
        %322 = vrot.lane.b32.xlu0 %v286, 64
        %v323 = vpop.permute.xlu0 %322
        %v325 = vsel %vm309, %v321, 0
        %vm327 = vcmask 1043456
        %v329 = vsel %vm327, %v323, 0
        %331 = vmatpush.bf16.msra.mxu0 0
        %332 = vmatpush.bf16.msra.mxu0 0
        %333 = vmatpush.bf16.msra.mxu0 0
        %334 = vmatpush.bf16.msra.mxu0 0
        %335 = vmatpush.bf16.msra.mxu0 0
        %336 = vmatpush.bf16.msra.mxu0 0
        %337 = vmatpush.bf16.msra.mxu0 0
        %338 = vmatpush.bf16.msra.mxu0 %v329
        %339 = vmatmul.bf16.gmra.mxu0 %v325
        %v340 = vpop.f32.mrf.mxu0
        %v341 = vadd.f32 0.0, %v340
        %v342 = vpop.f32.mrf.mxu0
        %343 = vdwg.mxu0
        %v344 = vpack.c.bf16 %v341, %v341
        %vm345 = vcmask 27648
        %346 = vst.msk [vmem:[#allocation2] sm:$0xf] %vm345, %v344
        %347 = vrot.lane.b32.xlu0 %v286, 124
        %v348 = vpop.permute.xlu0 %347
        %349 = vrot.lane.b32.xlu0 %v286, 92
        %v350 = vpop.permute.xlu0 %349
        %v352 = vsel %vm289, %v348, 0
        %v355 = vsel %vm289, %v350, 0
        %357 = vmatpush.bf16.xpose.msra.mxu0 0
        %358 = vmatpush.bf16.xpose.msra.mxu0 0
        %359 = vmatpush.bf16.xpose.msra.mxu0 0
        %360 = vmatpush.bf16.xpose.msra.mxu0 0
        %361 = vmatpush.bf16.xpose.msra.mxu0 0
        %362 = vmatpush.bf16.xpose.msra.mxu0 0
        %363 = vmatpush.bf16.xpose.msra.mxu0 0
        %364 = vmatpush.bf16.xpose.msra.mxu0 %v355
        %365 = vmatmul.bf16.gmra.mxu0 %v352
        %v366 = vpop.f32.mrf.mxu0
        %v367 = vadd.f32 0.0, %v366
        %v368 = vpop.f32.mrf.mxu0
        %369 = vdwg.mxu0
        %v370 = vsel %vm309, %v367, -inf
        %371 = vmax.xlane.f32.xlu0 %v370
        %v372 = vpop.xlane.xlu0 %371
        %v373 = vsub.f32 %v367, %v372
        %v374 = vmul.f32 %v373, 1.442695
        %v375 = vpow.pop %v374
        %v376 = vsel %vm309, %v375, 0.0
        %377 = vadd.xlane.f32.xlu0 %v376
        %v378 = vpop.xlane.xlu0 %377
        %v379 = vrcp.pop %v378
        %v380 = vmul.f32 %v375, %v379
        %v381 = vpack.c.bf16 %v380, %v380
        %382 = vrot.lane.b32.xlu0 %v286, 60
        %v383 = vpop.permute.xlu0 %382
        %v385 = vsel %vm309, %v381, 0
        %v388 = vsel %vm327, %v383, 0
        %390 = vmatpush.bf16.msra.mxu0 0
        %391 = vmatpush.bf16.msra.mxu0 0
        %392 = vmatpush.bf16.msra.mxu0 0
        %393 = vmatpush.bf16.msra.mxu0 0
        %394 = vmatpush.bf16.msra.mxu0 0
        %395 = vmatpush.bf16.msra.mxu0 0
        %396 = vmatpush.bf16.msra.mxu0 0
        %397 = vmatpush.bf16.msra.mxu0 %v388
        %398 = vmatmul.bf16.gmra.mxu0 %v385
        %v399 = vpop.f32.mrf.mxu0
        %v400 = vadd.f32 0.0, %v399
        %v401 = vpop.f32.mrf.mxu0
        %402 = vdwg.mxu0
        %v403 = vpack.c.bf16 %v400, %v400
        %405 = vrot.lane.b32.xlu0 %v403, 4
        %v406 = vpop.permute.xlu0 %405
        %vm408 = vcmask 60448
        %409 = vst.msk [vmem:[#allocation2] sm:$0xf] %vm408, %v406
        %410 = vrot.lane.b32.xlu0 %v286, 120
        %v411 = vpop.permute.xlu0 %410
        %412 = vrot.lane.b32.xlu0 %v286, 88
        %v413 = vpop.permute.xlu0 %412
        %v415 = vsel %vm289, %v411, 0
        %v418 = vsel %vm289, %v413, 0
        %420 = vmatpush.bf16.xpose.msra.mxu0 0
        %421 = vmatpush.bf16.xpose.msra.mxu0 0
        %422 = vmatpush.bf16.xpose.msra.mxu0 0
        %423 = vmatpush.bf16.xpose.msra.mxu0 0
        %424 = vmatpush.bf16.xpose.msra.mxu0 0
        %425 = vmatpush.bf16.xpose.msra.mxu0 0
        %426 = vmatpush.bf16.xpose.msra.mxu0 0
        %427 = vmatpush.bf16.xpose.msra.mxu0 %v418
        %428 = vmatmul.bf16.gmra.mxu0 %v415
        %v429 = vpop.f32.mrf.mxu0
        %v430 = vadd.f32 0.0, %v429
        %v431 = vpop.f32.mrf.mxu0
        %432 = vdwg.mxu0
        %v433 = vsel %vm309, %v430, -inf
        %434 = vmax.xlane.f32.xlu0 %v433
        %v435 = vpop.xlane.xlu0 %434
        %v436 = vsub.f32 %v430, %v435
        %v437 = vmul.f32 %v436, 1.442695
        %v438 = vpow.pop %v437
        %v439 = vsel %vm309, %v438, 0.0
        %440 = vadd.xlane.f32.xlu0 %v439
        %v441 = vpop.xlane.xlu0 %440
        %v442 = vrcp.pop %v441
        %v443 = vmul.f32 %v438, %v442
        %v444 = vpack.c.bf16 %v443, %v443
        %445 = vrot.lane.b32.xlu0 %v286, 56
        %v446 = vpop.permute.xlu0 %445
        %v448 = vsel %vm309, %v444, 0
        %v451 = vsel %vm327, %v446, 0
        %453 = vmatpush.bf16.msra.mxu0 0
        %454 = vmatpush.bf16.msra.mxu0 0
        %455 = vmatpush.bf16.msra.mxu0 0
        %456 = vmatpush.bf16.msra.mxu0 0
        %457 = vmatpush.bf16.msra.mxu0 0
        %458 = vmatpush.bf16.msra.mxu0 0
        %459 = vmatpush.bf16.msra.mxu0 0
        %460 = vmatpush.bf16.msra.mxu0 %v451
        %461 = vmatmul.bf16.gmra.mxu0 %v448
        %v462 = vpop.f32.mrf.mxu0
        %v463 = vadd.f32 0.0, %v462
        %v464 = vpop.f32.mrf.mxu0
        %465 = vdwg.mxu0
        %v466 = vpack.c.bf16 %v463, %v463
        %468 = vrot.lane.b32.xlu0 %v466, 8
        %v469 = vpop.permute.xlu0 %468
        %vm471 = vcmask 93248
        %472 = vst.msk [vmem:[#allocation2] sm:$0xf] %vm471, %v469
        %473 = vrot.lane.b32.xlu0 %v286, 116
        %v474 = vpop.permute.xlu0 %473
        %475 = vrot.lane.b32.xlu0 %v286, 84
        %v476 = vpop.permute.xlu0 %475
        %v478 = vsel %vm289, %v474, 0
        %v481 = vsel %vm289, %v476, 0
        %483 = vmatpush.bf16.xpose.msra.mxu0 0
        %484 = vmatpush.bf16.xpose.msra.mxu0 0
        %485 = vmatpush.bf16.xpose.msra.mxu0 0
        %486 = vmatpush.bf16.xpose.msra.mxu0 0
        %487 = vmatpush.bf16.xpose.msra.mxu0 0
        %488 = vmatpush.bf16.xpose.msra.mxu0 0
        %489 = vmatpush.bf16.xpose.msra.mxu0 0
        %490 = vmatpush.bf16.xpose.msra.mxu0 %v481
        %491 = vmatmul.bf16.gmra.mxu0 %v478
        %v492 = vpop.f32.mrf.mxu0
        %v493 = vadd.f32 0.0, %v492
        %v494 = vpop.f32.mrf.mxu0
        %495 = vdwg.mxu0
        %v496 = vsel %vm309, %v493, -inf
        %497 = vmax.xlane.f32.xlu0 %v496
        %v498 = vpop.xlane.xlu0 %497
        %v499 = vsub.f32 %v493, %v498
        %v500 = vmul.f32 %v499, 1.442695
        %v501 = vpow.pop %v500
        %v502 = vsel %vm309, %v501, 0.0
        %503 = vadd.xlane.f32.xlu0 %v502
        %v504 = vpop.xlane.xlu0 %503
        %v505 = vrcp.pop %v504
        %v506 = vmul.f32 %v501, %v505
        %v507 = vpack.c.bf16 %v506, %v506
        %508 = vrot.lane.b32.xlu0 %v286, 52
        %v509 = vpop.permute.xlu0 %508
        %v511 = vsel %vm309, %v507, 0
        %v514 = vsel %vm327, %v509, 0
        %516 = vmatpush.bf16.msra.mxu0 0
        %517 = vmatpush.bf16.msra.mxu0 0
        %518 = vmatpush.bf16.msra.mxu0 0
        %519 = vmatpush.bf16.msra.mxu0 0
        %520 = vmatpush.bf16.msra.mxu0 0
        %521 = vmatpush.bf16.msra.mxu0 0
        %522 = vmatpush.bf16.msra.mxu0 0
        %523 = vmatpush.bf16.msra.mxu0 %v514
        %524 = vmatmul.bf16.gmra.mxu0 %v511
        %v525 = vpop.f32.mrf.mxu0
        %v526 = vadd.f32 0.0, %v525
        %v527 = vpop.f32.mrf.mxu0
        %528 = vdwg.mxu0
        %v529 = vpack.c.bf16 %v526, %v526
        %531 = vrot.lane.b32.xlu0 %v529, 12
        %v532 = vpop.permute.xlu0 %531
        %vm534 = vcmask 126048
        %535 = vst.msk [vmem:[#allocation2] sm:$0xf] %vm534, %v532
        %536 = vrot.lane.b32.xlu0 %v286, 112
        %v537 = vpop.permute.xlu0 %536
        %538 = vrot.lane.b32.xlu0 %v286, 80
        %v539 = vpop.permute.xlu0 %538
        %v541 = vsel %vm289, %v537, 0
        %v544 = vsel %vm289, %v539, 0
        %546 = vmatpush.bf16.xpose.msra.mxu0 0
        %547 = vmatpush.bf16.xpose.msra.mxu0 0
        %548 = vmatpush.bf16.xpose.msra.mxu0 0
        %549 = vmatpush.bf16.xpose.msra.mxu0 0
        %550 = vmatpush.bf16.xpose.msra.mxu0 0
        %551 = vmatpush.bf16.xpose.msra.mxu0 0
        %552 = vmatpush.bf16.xpose.msra.mxu0 0
        %553 = vmatpush.bf16.xpose.msra.mxu0 %v544
        %554 = vmatmul.bf16.gmra.mxu0 %v541
        %v555 = vpop.f32.mrf.mxu0
        %v556 = vadd.f32 0.0, %v555
        %v557 = vpop.f32.mrf.mxu0
        %558 = vdwg.mxu0
        %v559 = vsel %vm309, %v556, -inf
        %560 = vmax.xlane.f32.xlu0 %v559
        %v561 = vpop.xlane.xlu0 %560
        %v562 = vsub.f32 %v556, %v561
        %v563 = vmul.f32 %v562, 1.442695
        %v564 = vpow.pop %v563
        %v565 = vsel %vm309, %v564, 0.0
        %566 = vadd.xlane.f32.xlu0 %v565
        %v567 = vpop.xlane.xlu0 %566
        %v568 = vrcp.pop %v567
        %v569 = vmul.f32 %v564, %v568
        %v570 = vpack.c.bf16 %v569, %v569
        %571 = vrot.lane.b32.xlu0 %v286, 48
        %v572 = vpop.permute.xlu0 %571
        %v574 = vsel %vm309, %v570, 0
        %v577 = vsel %vm327, %v572, 0
        %579 = vmatpush.bf16.msra.mxu0 0
        %580 = vmatpush.bf16.msra.mxu0 0
        %581 = vmatpush.bf16.msra.mxu0 0
        %582 = vmatpush.bf16.msra.mxu0 0
        %583 = vmatpush.bf16.msra.mxu0 0
        %584 = vmatpush.bf16.msra.mxu0 0
        %585 = vmatpush.bf16.msra.mxu0 0
        %586 = vmatpush.bf16.msra.mxu0 %v577
        %587 = vmatmul.bf16.gmra.mxu0 %v574
        %v588 = vpop.f32.mrf.mxu0
        %v589 = vadd.f32 0.0, %v588
        %v590 = vpop.f32.mrf.mxu0
        %591 = vdwg.mxu0
        %v592 = vpack.c.bf16 %v589, %v589
        %594 = vrot.lane.b32.xlu0 %v592, 16
        %v595 = vpop.permute.xlu0 %594
        %vm597 = vcmask 158848
        %598 = vst.msk [vmem:[#allocation2] sm:$0xf] %vm597, %v595
        %599 = vrot.lane.b32.xlu0 %v286, 108
        %v600 = vpop.permute.xlu0 %599
        %601 = vrot.lane.b32.xlu0 %v286, 76
        %v602 = vpop.permute.xlu0 %601
        %v604 = vsel %vm289, %v600, 0
        %v607 = vsel %vm289, %v602, 0
        %609 = vmatpush.bf16.xpose.msra.mxu0 0
        %610 = vmatpush.bf16.xpose.msra.mxu0 0
        %611 = vmatpush.bf16.xpose.msra.mxu0 0
        %612 = vmatpush.bf16.xpose.msra.mxu0 0
        %613 = vmatpush.bf16.xpose.msra.mxu0 0
        %614 = vmatpush.bf16.xpose.msra.mxu0 0
        %615 = vmatpush.bf16.xpose.msra.mxu0 0
        %616 = vmatpush.bf16.xpose.msra.mxu0 %v607
        %617 = vmatmul.bf16.gmra.mxu0 %v604
        %v618 = vpop.f32.mrf.mxu0
        %v619 = vadd.f32 0.0, %v618
        %v620 = vpop.f32.mrf.mxu0
        %621 = vdwg.mxu0
        %v622 = vsel %vm309, %v619, -inf
        %623 = vmax.xlane.f32.xlu0 %v622
        %v624 = vpop.xlane.xlu0 %623
        %v625 = vsub.f32 %v619, %v624
        %v626 = vmul.f32 %v625, 1.442695
        %v627 = vpow.pop %v626
        %v628 = vsel %vm309, %v627, 0.0
        %629 = vadd.xlane.f32.xlu0 %v628
        %v630 = vpop.xlane.xlu0 %629
        %v631 = vrcp.pop %v630
        %v632 = vmul.f32 %v627, %v631
        %v633 = vpack.c.bf16 %v632, %v632
        %634 = vrot.lane.b32.xlu0 %v286, 44
        %v635 = vpop.permute.xlu0 %634
        %v637 = vsel %vm309, %v633, 0
        %v640 = vsel %vm327, %v635, 0
        %642 = vmatpush.bf16.msra.mxu0 0
        %643 = vmatpush.bf16.msra.mxu0 0
        %644 = vmatpush.bf16.msra.mxu0 0
        %645 = vmatpush.bf16.msra.mxu0 0
        %646 = vmatpush.bf16.msra.mxu0 0
        %647 = vmatpush.bf16.msra.mxu0 0
        %648 = vmatpush.bf16.msra.mxu0 0
        %649 = vmatpush.bf16.msra.mxu0 %v640
        %650 = vmatmul.bf16.gmra.mxu0 %v637
        %v651 = vpop.f32.mrf.mxu0
        %v652 = vadd.f32 0.0, %v651
        %v653 = vpop.f32.mrf.mxu0
        %654 = vdwg.mxu0
        %v655 = vpack.c.bf16 %v652, %v652
        %657 = vrot.lane.b32.xlu0 %v655, 20
        %v658 = vpop.permute.xlu0 %657
        %vm660 = vcmask 191648
        %661 = vst.msk [vmem:[#allocation2] sm:$0xf] %vm660, %v658
        %662 = vrot.lane.b32.xlu0 %v286, 104
        %v663 = vpop.permute.xlu0 %662
        %664 = vrot.lane.b32.xlu0 %v286, 72
        %v665 = vpop.permute.xlu0 %664
        %v667 = vsel %vm289, %v663, 0
        %v670 = vsel %vm289, %v665, 0
        %672 = vmatpush.bf16.xpose.msra.mxu0 0
        %673 = vmatpush.bf16.xpose.msra.mxu0 0
        %674 = vmatpush.bf16.xpose.msra.mxu0 0
        %675 = vmatpush.bf16.xpose.msra.mxu0 0
        %676 = vmatpush.bf16.xpose.msra.mxu0 0
        %677 = vmatpush.bf16.xpose.msra.mxu0 0
        %678 = vmatpush.bf16.xpose.msra.mxu0 0
        %679 = vmatpush.bf16.xpose.msra.mxu0 %v670
        %680 = vmatmul.bf16.gmra.mxu0 %v667
        %v681 = vpop.f32.mrf.mxu0
        %v682 = vadd.f32 0.0, %v681
        %v683 = vpop.f32.mrf.mxu0
        %684 = vdwg.mxu0
        %v685 = vsel %vm309, %v682, -inf
        %686 = vmax.xlane.f32.xlu0 %v685
        %v687 = vpop.xlane.xlu0 %686
        %v688 = vsub.f32 %v682, %v687
        %v689 = vmul.f32 %v688, 1.442695
        %v690 = vpow.pop %v689
        %v691 = vsel %vm309, %v690, 0.0
        %692 = vadd.xlane.f32.xlu0 %v691
        %v693 = vpop.xlane.xlu0 %692
        %v694 = vrcp.pop %v693
        %v695 = vmul.f32 %v690, %v694
        %v696 = vpack.c.bf16 %v695, %v695
        %697 = vrot.lane.b32.xlu0 %v286, 40
        %v698 = vpop.permute.xlu0 %697
        %v700 = vsel %vm309, %v696, 0
        %v703 = vsel %vm327, %v698, 0
        %705 = vmatpush.bf16.msra.mxu0 0
        %706 = vmatpush.bf16.msra.mxu0 0
        %707 = vmatpush.bf16.msra.mxu0 0
        %708 = vmatpush.bf16.msra.mxu0 0
        %709 = vmatpush.bf16.msra.mxu0 0
        %710 = vmatpush.bf16.msra.mxu0 0
        %711 = vmatpush.bf16.msra.mxu0 0
        %712 = vmatpush.bf16.msra.mxu0 %v703
        %713 = vmatmul.bf16.gmra.mxu0 %v700
        %v714 = vpop.f32.mrf.mxu0
        %v715 = vadd.f32 0.0, %v714
        %v716 = vpop.f32.mrf.mxu0
        %717 = vdwg.mxu0
        %v718 = vpack.c.bf16 %v715, %v715
        %720 = vrot.lane.b32.xlu0 %v718, 24
        %v721 = vpop.permute.xlu0 %720
        %vm723 = vcmask 224448
        %724 = vst.msk [vmem:[#allocation2] sm:$0xf] %vm723, %v721
        %725 = vrot.lane.b32.xlu0 %v286, 100
        %v726 = vpop.permute.xlu0 %725
        %727 = vrot.lane.b32.xlu0 %v286, 68
        %v728 = vpop.permute.xlu0 %727
        %v730 = vsel %vm289, %v726, 0
        %v733 = vsel %vm289, %v728, 0
        %735 = vmatpush.bf16.xpose.msra.mxu0 0
        %736 = vmatpush.bf16.xpose.msra.mxu0 0
        %737 = vmatpush.bf16.xpose.msra.mxu0 0
        %738 = vmatpush.bf16.xpose.msra.mxu0 0
        %739 = vmatpush.bf16.xpose.msra.mxu0 0
        %740 = vmatpush.bf16.xpose.msra.mxu0 0
        %741 = vmatpush.bf16.xpose.msra.mxu0 0
        %742 = vmatpush.bf16.xpose.msra.mxu0 %v733
        %743 = vmatmul.bf16.gmra.mxu0 %v730
        %v744 = vpop.f32.mrf.mxu0
        %v745 = vadd.f32 0.0, %v744
        %v746 = vpop.f32.mrf.mxu0
        %747 = vdwg.mxu0
        %v748 = vsel %vm309, %v745, -inf
        %749 = vmax.xlane.f32.xlu0 %v748
        %v750 = vpop.xlane.xlu0 %749
        %v751 = vsub.f32 %v745, %v750
        %v752 = vmul.f32 %v751, 1.442695
        %v753 = vpow.pop %v752
        %v754 = vsel %vm309, %v753, 0.0
        %755 = vadd.xlane.f32.xlu0 %v754
        %v756 = vpop.xlane.xlu0 %755
        %v757 = vrcp.pop %v756
        %v758 = vmul.f32 %v753, %v757
        %v759 = vpack.c.bf16 %v758, %v758
        %760 = vrot.lane.b32.xlu0 %v286, 36
        %v761 = vpop.permute.xlu0 %760
        %v763 = vsel %vm309, %v759, 0
        %v766 = vsel %vm327, %v761, 0
        %768 = vmatpush.bf16.msra.mxu0 0
        %769 = vmatpush.bf16.msra.mxu0 0
        %770 = vmatpush.bf16.msra.mxu0 0
        %771 = vmatpush.bf16.msra.mxu0 0
        %772 = vmatpush.bf16.msra.mxu0 0
        %773 = vmatpush.bf16.msra.mxu0 0
        %774 = vmatpush.bf16.msra.mxu0 0
        %775 = vmatpush.bf16.msra.mxu0 %v766
        %776 = vmatmul.bf16.gmra.mxu0 %v763
        %v777 = vpop.f32.mrf.mxu0
        %v778 = vadd.f32 0.0, %v777
        %v779 = vpop.f32.mrf.mxu0
        %780 = vdwg.mxu0
        %v781 = vpack.c.bf16 %v778, %v778
        %783 = vrot.lane.b32.xlu0 %v781, 28
        %v784 = vpop.permute.xlu0 %783
        %vm786 = vcmask 257248
        %787 = vst.msk [vmem:[#allocation2] sm:$0xf] %vm786, %v784
        %v788 = vld [vmem:[#allocation2] sm:$0xf]
        %v789 = vld [vmem:[#allocation8] sm:$0xf]
        %v790 = vld [vmem:[#allocation8 + $0x4] sm:$0xf]
        %v791 = vld [vmem:[#allocation8 + $0x8] sm:$0xf]
        %v792 = vld [vmem:[#allocation8 + $0xc] sm:$0xf]
        %v793 = vld [vmem:[%s3] sm:$0x1]
        %v795 = vperm.slane %v793, 0
        %v801 = vunpack.c.l.b16 %v789
        %v802 = vunpack.c.l.b16 %v790
        %v803 = vunpack.c.l.b16 %v791
        %v804 = vunpack.c.l.b16 %v792
        %v805 = vpack.c.b16 %v802, %v801
        %v806 = vpack.c.b16 %v804, %v803
        %v810 = vsel %vm266, %v788, 0
        %812 = vmatpush.bf16.msra.mxu0 0
        %813 = vmatpush.bf16.msra.mxu0 0
        %814 = vmatpush.bf16.msra.mxu0 0
        %815 = vmatpush.bf16.msra.mxu0 0
        %816 = vmatpush.bf16.msra.mxu0 0
        %817 = vmatpush.bf16.msra.mxu0 0
        %818 = vmatpush.bf16.msra.mxu0 %v806
        %819 = vmatpush.bf16.msra.mxu0 %v805
        %820 = vmatmul.bf16.gmra.mxu0 %v810
        %v821 = vpop.f32.mrf.mxu0
        %v822 = vadd.f32 %v795, %v821
        %v823 = vpop.f32.mrf.mxu0
        %824 = vdwg.mxu0
        %825 = vst.msk [vmem:[%s247] sm:$0xff] %vm266, %v822
        %s826 = sand.u32 %s119, 1
        %s827 = scalar_lea.sflag [#allocation5], %s826
        %s828 = sand.u32 %s119, 1
        %s829 = smul.addr %s828, 8
        %s830 = scalar_lea.vmem [#allocation9], %s829
        // Predicated region
        $region49: #{tpu_custom_call.1} parent=35 // pred_check
          %p831 = pneg %p129
        $region50: #{tpu_custom_call.1} parent=35 // pred_check_branch
          %833 = sbr.rel (%p831) target = $region52
        $region51: #{tpu_custom_call.1} parent=35 // pred_region
          %835 = vsyncadd %s827, 0
          %s836 = smul.addr %s22, 8
          %s837 = scalar_lea.hbm %s4, %s836
          %s839 = sshll.u32 %s830, 4
          %s840 = int_to_ptr.vmem [resolvable:$true] %s839
          %s841 = sshll.u32 %s837, 4
          %s842 = int_to_ptr.hbm [resolvable:$true] %s841
          %844 = dma.vmem_to_hbm [thread:$0]  %s840, 128, %s842, %s827
        $region52: #{tpu_custom_call.1} parent=35 // pred_fallthru
          _
      $region36: #{tpu_custom_call.1} parent=5 // pred_fallthru
        _
      %p845 = scmp.le.s32.totalorder 2, %s17
      // Predicated region
      $region53: #{tpu_custom_call.1} parent=5 // pred_check
        %p846 = pneg %p845
      $region54: #{tpu_custom_call.1} parent=5 // pred_check_branch
        %848 = sbr.rel (%p846) target = $region56
      $region55: #{tpu_custom_call.1} parent=5 // pred_region
        %s849 = ssub.s32 %s17, 2
        // Predicated region
        $region57: #{tpu_custom_call.1} parent=55 // pred_check
          %p850 = pneg %p135
        $region58: #{tpu_custom_call.1} parent=55 // pred_check_branch
          %852 = sbr.rel (%p850) target = $region60
        $region59: #{tpu_custom_call.1} parent=55 // pred_region
          %s853 = sand.u32 %s120, 1
          %s854 = scalar_lea.sflag [#allocation5], %s853
          %s855 = sand.u32 %s120, 1
          %s856 = smul.addr %s855, 8
          %s857 = scalar_lea.vmem [#allocation9], %s856
          %859 = dma.done %s854, 128
        $region60: #{tpu_custom_call.1} parent=55 // pred_fallthru
          _
      $region56: #{tpu_custom_call.1} parent=5 // pred_fallthru
        _
    $region6: #{tpu_custom_call.1} parent=1 // loop_footer
      %s21 = sadd.s32 1, %s17
    $region7: #{tpu_custom_call.1} parent=1 // loop_footer_branch
      %16 = sbr.rel target = $region3
    $region8: #{tpu_custom_call.1} parent=1 // loop_exit
      _
    %860 = vsyncpa [#allocation4], 1
    %s861 = scalar_lea.sflag [#allocation4], 1
    %862 = vsyncpa %s861, 1
    %863 = vsyncpa [#allocation7], 1
    %864 = vsyncpa [#allocation5], 1
    %s865 = scalar_lea.sflag [#allocation5], 1
    %866 = vsyncpa %s865, 1

</llo_original>
